<compile_context>
chip_gen: v7x
topology: tpu7x:2x2x1
jax: 0.10.0
libtpu: 0.0.40
codegen_flags: <defaults>
</compile_context>

<pallas_src>
import jax
import jax.numpy as jnp
from jax import lax
from jax.experimental import pallas as pl
from jax.experimental.pallas import tpu as pltpu

EPS = 0.01

_SUBLANE = 8
_LANE = 128


def _vmem_budget():
    """Generation-aware (tile_budget_bytes, vmem_limit_bytes, small_vmem?)."""
    cap = None
    try:
        cap = getattr(pltpu.get_tpu_info(), "vmem_capacity_bytes", None)
    except Exception:  # pragma: no cover - e.g. no TPU visible at trace time
        cap = None
    if cap is not None and cap <= 80 * 1024 * 1024:
        # v7x-class: 64 MiB VMEM per TensorCore. Keep pipelined tiles small and
        # leave headroom for compiler-internal scratch; the pass is HBM-bound so
        # smaller tiles cost ~0% (already past the bandwidth knee).
        return 20 * 1024 * 1024, 32 * 1024 * 1024, True
    # v5e / v6e: 128 MiB physical VMEM.
    return 36 * 1024 * 1024, 48 * 1024 * 1024, False


def _largest_tile(dim, unit, max_size):
    """Largest tile <= min(dim, max_size): prefer a multiple-of-`unit` divisor of
    `dim` (no ragged tail), else fall back to the largest multiple of `unit`."""
    if dim <= max_size:
        return dim
    cap = (min(dim, max_size) // unit) * unit
    t = cap
    while t >= unit:
        if dim % t == 0:
            return t
        t -= unit
    return max(cap, unit)


def _pick_train_tiles(sq, sk, itemsize, bias_itemsize, budget, in_bufs):
    """(tile_sq, tile_sk) whose pipelined buffers fit the per-generation budget."""
    per_elem = (in_bufs + 2) * itemsize + bias_itemsize  # in bufs + 2 out bufs + bias scratch
    if sq * sk * per_elem <= budget:
        return sq, sk
    # Prefer full-width rows (lane-dense, contiguous DMA) and tile Sq.
    max_rows = budget // (sk * per_elem)
    if max_rows >= _SUBLANE:
        return _largest_tile(sq, _SUBLANE, min(max_rows, 1024)), sk
    # Very long keys: even 8 rows x Sk would blow the budget -> lane-tile Sk too.
    tile_sq = min(sq, _SUBLANE)
    max_cols = max(budget // (tile_sq * per_elem), _LANE)
    return tile_sq, _largest_tile(sk, _LANE, max_cols)


def _pick_decode_tile_sk(rows, sk, itemsize, budget):
    """Largest Sk tile (multiple of 128) for the packed decode path, purely from budget."""
    per_col = rows * 4 * itemsize  # 2 input bufs + 2 output bufs
    max_cols = max(budget // per_col, _LANE)
    if sk <= max_cols:
        return sk
    return _largest_tile(sk, _LANE, max_cols)


def _maybe_buffered_spec(block_shape, index_map, buffers):
    """BlockSpec with an N-deep pipeline when requested (falls back cleanly)."""
    if buffers != 2:
        try:
            return pl.BlockSpec(block_shape, index_map, pipeline_mode=pl.Buffered(buffers))
        except TypeError:
            pass
    return pl.BlockSpec(block_shape, index_map)


# ---------------------------------------------------------------------------
# Kernels
# ---------------------------------------------------------------------------

def _kerple_train_cached_kernel(p_ref, a_ref, x_ref, o_ref, bias_ref):
    # p_ref / a_ref: SMEM (H,) f32
    # x_ref / o_ref: VMEM (TILE_SQ, TILE_SK)   (batch & head dims squeezed away)
    # bias_ref:      VMEM (TILE_SQ, TILE_SK) scratch, cached across the batch axis
    h = pl.program_id(0)
    q = pl.program_id(1)
    k = pl.program_id(2)
    b = pl.program_id(3)

    @pl.when(b == 0)
    def _():
        p = jnp.maximum(p_ref[h], EPS)  # clamp(min=eps), as in forward()
        a = jnp.maximum(a_ref[h], EPS)
        tq, tk = bias_ref.shape
        i = lax.broadcasted_iota(jnp.int32, (tq, tk), 0) + q * tq
        j = lax.broadcasted_iota(jnp.int32, (tq, tk), 1) + k * tk
        # tril(i - j): distance below/on the diagonal, 0 above it.
        diff = jnp.maximum(i - j, 0).astype(jnp.float32)
        bias_ref[...] = (-p * jnp.log1p(a * diff)).astype(bias_ref.dtype)

    o_ref[...] = (
        x_ref[...].astype(jnp.float32) + bias_ref[...].astype(jnp.float32)
    ).astype(o_ref.dtype)


def _kerple_train_nocache_kernel(p_ref, a_ref, x_ref, o_ref):
    # Small-grid fallback: bias recomputed per step so the B axis can stay
    # "parallel" (keeps both v7x TensorCores busy when H * q_tiles * k_tiles < 2).
    h = pl.program_id(0)
    q = pl.program_id(1)
    k = pl.program_id(2)
    p = jnp.maximum(p_ref[h], EPS)
    a = jnp.maximum(a_ref[h], EPS)
    tq, tk = x_ref.shape
    i = lax.broadcasted_iota(jnp.int32, (tq, tk), 0) + q * tq
    j = lax.broadcasted_iota(jnp.int32, (tq, tk), 1) + k * tk
    diff = jnp.maximum(i - j, 0).astype(jnp.float32)
    bias = -p * jnp.log1p(a * diff)
    o_ref[...] = (x_ref[...].astype(jnp.float32) + bias).astype(o_ref.dtype)


# ---------------------------------------------------------------------------
# Wrapper
# ---------------------------------------------------------------------------

def kerple_log_bias_add(x, bias_p, bias_a, *, assume_donatable=True):
    """x: [B, H, Sq, Sk]; bias_p, bias_a: [H] (or [H,1,1]). Returns x + kerple bias.

    If `assume_donatable` is True the score buffer is updated in place via
    input_output_aliases (the caller must be able to donate it); set False to
    avoid XLA inserting a defensive full copy for non-donatable buffers.
    """
    bias_p = jnp.reshape(bias_p, (-1,)).astype(jnp.float32)
    bias_a = jnp.reshape(bias_a, (-1,)).astype(jnp.float32)
    B, H, Sq, Sk = x.shape
    itemsize = jnp.dtype(x.dtype).itemsize
    budget, vmem_limit, small_vmem = _vmem_budget()
    io_aliases = {2: 0} if assume_donatable else {}

    if Sq == Sk:
        # bf16 scores -> bf16 bias scratch (half the scratch pressure); f32 kept for f32.
        bias_dtype = jnp.float32 if itemsize >= 4 else x.dtype
        bias_itemsize = jnp.dtype(bias_dtype).itemsize
        in_bufs = 3 if small_vmem else 2
        tile_sq, tile_sk = _pick_train_tiles(Sq, Sk, itemsize, bias_itemsize, budget, in_bufs)
        qt = pl.cdiv(Sq, tile_sq)
        kt = pl.cdiv(Sk, tile_sk)
        # B innermost: the per-(h,q,k) bias tile is computed once and reused
        # across the batch, unless that would starve the parallel axes.
        cache_bias = (B > 1) and (H * qt * kt >= 2)

        grid = (H, qt, kt, B)
        block_shape = (pl.Squeezed(), pl.Squeezed(), tile_sq, tile_sk)
        idx_map = lambda h, q, k, b: (b, h, q, k)
        x_spec = _maybe_buffered_spec(block_shape, idx_map, in_bufs)
        o_spec = pl.BlockSpec(block_shape, idx_map)
        smem_spec = pl.BlockSpec(memory_space=pltpu.MemorySpace.SMEM)

        cost = pl.CostEstimate(
            flops=5 * B * H * Sq * Sk,
            transcendentals=(H if cache_bias else B * H) * Sq * Sk,
            bytes_accessed=2 * B * H * Sq * Sk * itemsize,
        )

        if cache_bias:
            kernel = _kerple_train_cached_kernel
            scratch = [pltpu.VMEM((tile_sq, tile_sk), bias_dtype)]
            semantics = ("parallel", "parallel", "parallel", "arbitrary")
        else:
            kernel = _kerple_train_nocache_kernel
            scratch = []
            semantics = ("parallel", "parallel", "parallel", "parallel")

        # TODO(synk): if Sk is not a multiple of 128, pad the key dim upstream so
        # the writeback stays full-lane unmasked stores (biggest lever on v5e).
        return pl.pallas_call(
            kernel,
            out_shape=jax.ShapeDtypeStruct((B, H, Sq, Sk), x.dtype),
            grid_spec=pl.GridSpec(
                grid=grid,
                in_specs=[smem_spec, smem_spec, x_spec],
                out_specs=o_spec,
                scratch_shapes=scratch,
            ),
            input_output_aliases=io_aliases,
            compiler_params=pltpu.CompilerParams(
                dimension_semantics=semantics,
                vmem_limit_bytes=vmem_limit,
            ),
            cost_estimate=cost,
        )(bias_p, bias_a, x)

    # Inference path: sq == 1, bias row seq_len_k - 1 of the full matrix,
    # matching bias[:, seq_len_k - 1, :] in the torch code.
    assert Sq == 1, "assumption sq == sk unless at inference time with cache (sq == 1)"
    # TODO(synk): at decode sizes this add should be fused into the attention
    # kernel (or left to XLA as plain jnp); the standalone pallas_call is a fallback.

    rows = B * H
    x2d = x.reshape(rows, Sk)
    # Per-row p/a columns (row r corresponds to head r % H), broadcast across lanes.
    p_rows = jnp.broadcast_to(bias_p[None, :], (B, H)).reshape(rows, 1)
    a_rows = jnp.broadcast_to(bias_a[None, :], (B, H)).reshape(rows, 1)
    tile_sk = _pick_decode_tile_sk(rows, Sk, itemsize, budget)

    def _decode_kernel(p_ref, a_ref, x_ref, o_ref):
        k = pl.program_id(0)
        r, tk = x_ref.shape
        p = jnp.maximum(p_ref[...], EPS)  # (rows, 1)
        a = jnp.maximum(a_ref[...], EPS)
        j = lax.broadcasted_iota(jnp.int32, (r, tk), 1) + k * tk
        diff = jnp.maximum((Sk - 1) - j, 0).astype(jnp.float32)
        bias = -p * jnp.log1p(a * diff)
        o_ref[...] = (x_ref[...].astype(jnp.float32) + bias).astype(o_ref.dtype)

    cost = pl.CostEstimate(
        flops=5 * rows * Sk,
        transcendentals=rows * Sk,
        bytes_accessed=2 * rows * Sk * itemsize,
    )
    pa_spec = pl.BlockSpec((rows, 1), lambda k: (0, 0))
    xs_spec = pl.BlockSpec((rows, tile_sk), lambda k: (0, k))
    out2d = pl.pallas_call(
        _decode_kernel,
        out_shape=jax.ShapeDtypeStruct((rows, Sk), x.dtype),
        grid_spec=pl.GridSpec(
            grid=(pl.cdiv(Sk, tile_sk),),
            in_specs=[pa_spec, pa_spec, xs_spec],
            out_specs=xs_spec,
        ),
        input_output_aliases=io_aliases,
        compiler_params=pltpu.CompilerParams(
            dimension_semantics=("parallel",),
            vmem_limit_bytes=vmem_limit,
        ),
        cost_estimate=cost,
    )(p_rows, a_rows, x2d)
    return out2d.reshape(B, H, 1, Sk)


# ---------------------------------------------------------------------------
# Pure-JAX reference mirroring the torch forward
# ---------------------------------------------------------------------------

def _reference(x, bias_p, bias_a):
    bias_p = jnp.clip(jnp.reshape(bias_p, (-1, 1, 1)).astype(jnp.float32), EPS, None)
    bias_a = jnp.clip(jnp.reshape(bias_a, (-1, 1, 1)).astype(jnp.float32), EPS, None)
    sq, sk = x.shape[-2], x.shape[-1]
    idx = jnp.arange(sk, dtype=jnp.float32)
    diff = jnp.tril(idx[:, None] - idx[None, :])
    bias = -bias_p * jnp.log1p(bias_a * diff)  # [H, Sk, Sk]
    if sq != sk:
        bias = bias[:, sk - 1 : sk, :]  # [H, 1, Sk]
    return (x.astype(jnp.float32) + bias[None]).astype(x.dtype)


if __name__ == "__main__":
    key = jax.random.PRNGKey(0)
    k_x, k_p, k_a, k_x1, k_xb, k_xs = jax.random.split(key, 6)

    B, H, S = 2, 4, 128  # batch, heads, seq (sq == sk)

    # Deterministic parameter init matching __init__:
    #   bias_p = uniform(H)[:,None,None] * 2 ; bias_a = uniform(H)[:,None,None] * 1
    bias_p = jax.random.uniform(k_p, (H, 1, 1), jnp.float32) * 2.0
    bias_a = jax.random.uniform(k_a, (H, 1, 1), jnp.float32) * 1.0

    # Training path, f32 (sq == sk). Reference computed first: the kernel may
    # alias / update the score buffer in place.
    x = jax.random.normal(k_x, (B, H, S, S), jnp.float32)
    ref = jax.block_until_ready(_reference(x, bias_p, bias_a))
    out = jax.block_until_ready(kerple_log_bias_add(x, bias_p, bias_a))
    assert out.shape == (B, H, S, S) and out.dtype == jnp.float32
    assert jnp.allclose(out, ref, atol=1e-5, rtol=1e-5), "train-path (f32) mismatch"

    # Training path, bf16 (exercises the reduced-precision bias scratch).
    xb = (jax.random.normal(k_xb, (B, H, S, S), jnp.float32)).astype(jnp.bfloat16)
    refb = jax.block_until_ready(_reference(xb, bias_p, bias_a))
    outb = jax.block_until_ready(kerple_log_bias_add(xb, bias_p, bias_a))
    assert outb.dtype == jnp.bfloat16
    assert jnp.allclose(
        outb.astype(jnp.float32), refb.astype(jnp.float32), atol=0.15, rtol=0.05
    ), "train-path (bf16) mismatch"

    # Small-grid fallback (H == 1, single tile): bias recomputed, B kept parallel.
    xs = jax.random.normal(k_xs, (2, 1, 64, 64), jnp.float32)
    p1, a1 = bias_p[:1], bias_a[:1]
    refs = jax.block_until_ready(_reference(xs, p1, a1))
    outs = jax.block_until_ready(kerple_log_bias_add(xs, p1, a1))
    assert jnp.allclose(outs, refs, atol=1e-5, rtol=1e-5), "small-grid fallback mismatch"

    # Inference path (sq == 1, cached keys).
    x1 = jax.random.normal(k_x1, (B, H, 1, S), jnp.float32)
    ref1 = jax.block_until_ready(_reference(x1, bias_p, bias_a))
    out1 = jax.block_until_ready(kerple_log_bias_add(x1, bias_p, bias_a))
    assert out1.shape == (B, H, 1, S) and out1.dtype == jnp.float32
    assert jnp.allclose(out1, ref1, atol=1e-5, rtol=1e-5), "decode-path mismatch"

    print("KERNEL_OK")
</pallas_src>

<mosaic_0001>
module attributes {stable_mosaic.version = 11 : i64} {
  func.func @_kerple_train_cached_kernel(%arg0: i32, %arg1: i32, %arg2: i32, %arg3: i32, %arg4: memref<4xf32, #tpu.memory_space<smem>>, %arg5: memref<4xf32, #tpu.memory_space<smem>>, %arg6: memref<1x1x128x128xf32, #tpu.memory_space<vmem>>, %arg7: memref<1x1x128x128xf32, #tpu.memory_space<vmem>>, %arg8: memref<128x128xf32, #tpu.memory_space<vmem>>) attributes {dimension_semantics = [#tpu.dimension_semantics<parallel>, #tpu.dimension_semantics<parallel>, #tpu.dimension_semantics<parallel>, #tpu.dimension_semantics<arbitrary>], iteration_bounds = array<i64: 4, 1, 1, 2>, scalar_prefetch = 0 : i64, scratch_operands = 1 : i64, tpu.core_type = #tpu.core_type<tc>, window_params = [{transform_indices = @transform_0, window_bounds = array<i64: 4>}, {transform_indices = @transform_1, window_bounds = array<i64: 4>}, {transform_indices = @transform_2, window_bounds = array<i64: 1, 1, 128, 128>}, {transform_indices = @transform_3, window_bounds = array<i64: 1, 1, 128, 128>}]} {
    %c0_i32 = arith.constant 0 : i32
    %0 = arith.cmpi eq, %arg3, %c0_i32 : i32
    %1 = arith.extui %0 : i1 to i32
    %c0_i32_0 = arith.constant 0 : i32
    %2 = arith.cmpi ne, %1, %c0_i32_0 : i32
    scf.if %2 {
      %10 = arith.index_cast %arg0 : i32 to index
      %11 = memref.load %arg4[%10] : memref<4xf32, #tpu.memory_space<smem>>
      %cst = arith.constant 0.00999999977 : f32
      %12 = arith.maximumf %11, %cst : f32
      %13 = arith.index_cast %arg0 : i32 to index
      %14 = memref.load %arg5[%13] : memref<4xf32, #tpu.memory_space<smem>>
      %cst_10 = arith.constant 0.00999999977 : f32
      %15 = arith.maximumf %14, %cst_10 : f32
      %16 = tpu.iota {dimensions = array<i32: 0>} : vector<128x128xi32>
      %c128_i32 = arith.constant 128 : i32
      %17 = arith.muli %arg1, %c128_i32 : i32
      %18 = vector.broadcast %17 : i32 to vector<128x128xi32>
      %19 = arith.addi %16, %18 : vector<128x128xi32>
      %20 = tpu.iota {dimensions = array<i32: 1>} : vector<128x128xi32>
      %c128_i32_11 = arith.constant 128 : i32
      %21 = arith.muli %arg2, %c128_i32_11 : i32
      %22 = vector.broadcast %21 : i32 to vector<128x128xi32>
      %23 = arith.addi %20, %22 : vector<128x128xi32>
      %24 = arith.subi %19, %23 : vector<128x128xi32>
      %c0_i32_12 = arith.constant 0 : i32
      %25 = vector.broadcast %c0_i32_12 : i32 to vector<128x128xi32>
      %26 = arith.maxsi %24, %25 : vector<128x128xi32>
      %27 = arith.sitofp %26 : vector<128x128xi32> to vector<128x128xf32>
      %cst_13 = arith.constant 0.000000e+00 : f32
      %28 = arith.subf %cst_13, %12 : f32
      %29 = vector.broadcast %15 : f32 to vector<128x128xf32>
      %30 = arith.mulf %29, %27 : vector<128x128xf32>
      %31 = math.log1p %30 : vector<128x128xf32>
      %32 = vector.broadcast %28 : f32 to vector<128x128xf32>
      %33 = arith.mulf %32, %31 : vector<128x128xf32>
      %c0_14 = arith.constant 0 : index
      %c0_15 = arith.constant 0 : index
      %34 = vector.load %arg8[%c0_14, %c0_15] : memref<128x128xf32, #tpu.memory_space<vmem>>, vector<128x128xf32>
      tpu.vector_store %arg8[%c0_14, %c0_15], %33 {strides = array<i32>} : memref<128x128xf32, #tpu.memory_space<vmem>>, vector<128x128xf32>,
    } else {
    }
    %c0 = arith.constant 0 : index
    %c0_1 = arith.constant 0 : index
    %c0_2 = arith.constant 0 : index
    %c0_3 = arith.constant 0 : index
    %3 = vector.load %arg6[%c0, %c0_1, %c0_2, %c0_3] : memref<1x1x128x128xf32, #tpu.memory_space<vmem>>, vector<1x1x128x128xf32>
    %4 = vector.shape_cast %3 : vector<1x1x128x128xf32> to vector<128x128xf32>
    %c0_4 = arith.constant 0 : index
    %c0_5 = arith.constant 0 : index
    %5 = vector.load %arg8[%c0_4, %c0_5] : memref<128x128xf32, #tpu.memory_space<vmem>>, vector<128x128xf32>
    %6 = arith.addf %4, %5 : vector<128x128xf32>
    %c0_6 = arith.constant 0 : index
    %c0_7 = arith.constant 0 : index
    %c0_8 = arith.constant 0 : index
    %c0_9 = arith.constant 0 : index
    %7 = vector.load %arg7[%c0_6, %c0_7, %c0_8, %c0_9] : memref<1x1x128x128xf32, #tpu.memory_space<vmem>>, vector<1x1x128x128xf32>
    %8 = vector.shape_cast %7 : vector<1x1x128x128xf32> to vector<128x128xf32>
    %9 = vector.shape_cast %6 : vector<128x128xf32> to vector<1x1x128x128xf32>
    tpu.vector_store %arg7[%c0_6, %c0_7, %c0_8, %c0_9], %9 {strides = array<i32>} : memref<1x1x128x128xf32, #tpu.memory_space<vmem>>, vector<1x1x128x128xf32>,
    return
  }
  func.func @transform_0(%arg0: i32, %arg1: i32, %arg2: i32, %arg3: i32) -> i32 {
    %c0_i32 = arith.constant 0 : i32
    %c0_i32_0 = arith.constant 0 : i32
    return %c0_i32 : i32
  }
  func.func @transform_1(%arg0: i32, %arg1: i32, %arg2: i32, %arg3: i32) -> i32 {
    %c0_i32 = arith.constant 0 : i32
    %c0_i32_0 = arith.constant 0 : i32
    return %c0_i32 : i32
  }
  func.func @transform_2(%arg0: i32, %arg1: i32, %arg2: i32, %arg3: i32) -> (i32, i32, i32, i32) {
    %c0_i32 = arith.constant 0 : i32
    return %arg3, %arg0, %arg1, %arg2 : i32, i32, i32, i32
  }
  func.func @transform_3(%arg0: i32, %arg1: i32, %arg2: i32, %arg3: i32) -> (i32, i32, i32, i32) {
    %c0_i32 = arith.constant 0 : i32
    return %arg3, %arg0, %arg1, %arg2 : i32, i32, i32, i32
  }
}

</mosaic_0001>

<llo_original>
// kernel: tpu_custom_call.1
$region0: #{tpu_custom_call.1}
  #allocation0 [shape = 'u32[]', space=smem, size = 0x4, offset = 0x4, fixed_abs, tag = 'smem constant byte address 0x4 - core index']
  #allocation1 [shape = 'u32[144,128]{1,0:T(1,128)}', space=vmem, size = 0x12000, scoped, tag = 'internal scratch']
  #allocation2 [shape = 'f32[128,128]{1,0:T(8,128)}', space=vmem, size = 0x10000, scoped, tag = 'scratch operand']
  %s0 = inlined_call_operand.vmem [shape: f32[4], index: 0, kind: input, shape index: {}]
  %s1 = inlined_call_operand.vmem [shape: f32[4], index: 1, kind: input, shape index: {}]
  %s2 = inlined_call_operand.hbm [shape: f32[2,4,128,128], index: 2, kind: input, shape index: {}, may-alias: {2,3}]
  %s3 = inlined_call_operand.hbm [shape: f32[2,4,128,128], index: 3, kind: output, shape index: {}, may-alias: {2,3}]
  %s4 = sld [smem:[#allocation0]]
  $region61: #{tpu_custom_call.1} parent=0
    _
  %s6 = ssub.s32 1, %s4
  %s7 = scalar_select 0, %s6, %s4
  $region1: #{tpu_custom_call.1} parent=0
    #allocation3 [shape = 'u8[512]{0}', space=smem, size = 0x200, scoped, tag = 'input window, operand 0, single buffered']
    #allocation4 [shape = 's32[2]{0}', space=sflag, size = 0x8, scoped, tag = 'scoped memory for tpu_custom_call.1']
    #allocation5 [shape = 's32[2]{0}', space=sflag, size = 0x8, scoped, tag = 'scoped memory for tpu_custom_call.1']
    #allocation6 [shape = 's32[2]{0}', space=sflag, size = 0x8, scoped, tag = 'scoped memory for tpu_custom_call.1']
    #allocation7 [shape = 'u8[512]{0}', space=smem, size = 0x200, scoped, tag = 'input window, operand 1, single buffered']
    #allocation8 [shape = 's32[1]{0}', space=sflag, size = 0x4, scoped, tag = 'scoped memory for tpu_custom_call.1']
    #allocation9 [shape = 'u8[131072]{0}', space=vmem, size = 0x20000, scoped, tag = 'input window, operand 2']
    #allocation10 [shape = 'u8[131072]{0}', space=vmem, size = 0x20000, scoped, tag = 'output window, operand 0']
    %8 = vsyncpa [#allocation6], 0
    %9 = vsyncpa [#allocation8], 0
    %10 = vsyncpa [#allocation4], 0
    %s11 = scalar_lea.sflag [#allocation4], 1
    %12 = vsyncpa %s11, 0
    %13 = vsyncpa [#allocation5], 0
    %s14 = scalar_lea.sflag [#allocation5], 1
    %15 = vsyncpa %s14, 0
    loop: start=0, step=1, limit=10
    $region2: #{tpu_custom_call.1} parent=1 // loop_pre_header
      _
    $region3: #{tpu_custom_call.1} parent=1 // loop_header
      %s17 = sphi 0, %s21
      %p18 = scmp.ge.s32.totalorder %s17, 10
      %s24 = sphi 0, %s50
      %s25 = sphi 0, %s46
      %s26 = sphi 0, %s42
      %s27 = sphi 0, %s38
      %s28 = sphi 0, %s24
      %s29 = sphi 0, %s25
      %s30 = sphi 0, %s26
      %s31 = sphi 0, %s27
      %s32 = sphi 0, %s28
      %s33 = sphi 0, %s29
      %s34 = sphi 0, %s30
      %s35 = sphi 0, %s31
      %s51 = sphi 0, %s51
      %s53 = sphi 0, %s51
      %s54 = sphi 0, %s53
      %s68 = sphi 0, %s54
      %s72 = sphi 0, %s72
      %s74 = sphi 0, %s72
      %s75 = sphi 0, %s74
      %s89 = sphi 0, %s75
      %s101 = sphi 0, %s103
      %s104 = sphi 0, %s101
      %s105 = sphi 0, %s104
      %s121 = sphi 0, %s105
      %s133 = sphi 0, %s135
      %s136 = sphi 0, %s133
      %s137 = sphi 0, %s136
      %s153 = sphi 0, %s137
    $region4: #{tpu_custom_call.1} parent=1 // loop_header_branch
      %20 = sbr.rel (%p18) target = $region8
    $region5: #{tpu_custom_call.1} parent=1 // loop_body
      %s22 = ssub.s32 %s17, 1
      %s23 = ssub.s32 %s17, 2
      %s36 = sadd.s32 1, %s27
      %p37 = scmp.ge.s32.totalorder %s36, 2
      %s38 = scalar_select %p37, 0, %s36
      %s39 = sadd.s32 1, %s26
      %s40 = scalar_select %p37, %s39, %s26
      %p41 = scmp.ge.s32.totalorder %s40, 1
      %s42 = scalar_select %p41, 0, %s40
      %s43 = sadd.s32 1, %s25
      %s44 = scalar_select %p41, %s43, %s25
      %p45 = scmp.ge.s32.totalorder %s44, 1
      %s46 = scalar_select %p45, 0, %s44
      %s47 = sadd.s32 1, %s24
      %s48 = scalar_select %p45, %s47, %s24
      %p49 = scmp.ge.s32.totalorder %s48, 4
      %s50 = scalar_select %p49, 0, %s48
      %s52 = sadd.s32 %s51, 1
      %p55 = scmp.eq.s32.totalorder %s17, 7
      %p56 = scmp.ne.s32.totalorder %s51, %s53
      %p57 = scmp.eq.s32.totalorder %s17, 0
      %p58 = por %p56, %p57
      %p59 = scmp.ne.s32.totalorder %s51, %s53
      %p60 = scmp.eq.s32.totalorder %s22, 7
      %p61 = por %p59, %p60
      %p62 = scmp.ne.s32.totalorder %s53, %s54
      %p63 = scmp.eq.s32.totalorder %s22, 0
      %p64 = por %p62, %p63
      %p65 = scmp.ne.s32.totalorder %s53, %s54
      %p66 = scmp.eq.s32.totalorder %s23, 7
      %p67 = por %p65, %p66
      %p69 = scmp.ne.s32.totalorder %s54, %s68
      %p70 = scmp.eq.s32.totalorder %s23, 0
      %p71 = por %p69, %p70
      %s73 = sadd.s32 %s72, 1
      %p76 = scmp.eq.s32.totalorder %s17, 7
      %p77 = scmp.ne.s32.totalorder %s72, %s74
      %p78 = scmp.eq.s32.totalorder %s17, 0
      %p79 = por %p77, %p78
      %p80 = scmp.ne.s32.totalorder %s72, %s74
      %p81 = scmp.eq.s32.totalorder %s22, 7
      %p82 = por %p80, %p81
      %p83 = scmp.ne.s32.totalorder %s74, %s75
      %p84 = scmp.eq.s32.totalorder %s22, 0
      %p85 = por %p83, %p84
      %p86 = scmp.ne.s32.totalorder %s74, %s75
      %p87 = scmp.eq.s32.totalorder %s23, 7
      %p88 = por %p86, %p87
      %p90 = scmp.ne.s32.totalorder %s75, %s89
      %p91 = scmp.eq.s32.totalorder %s23, 0
      %p92 = por %p90, %p91
      %s93 = ssub.s32 %s27, %s38
      %s94 = ssub.s32 %s24, %s50
      %s95 = sor.u32 %s93, %s94
      %s96 = ssub.s32 %s25, %s46
      %s97 = sor.u32 %s95, %s96
      %s98 = ssub.s32 %s26, %s42
      %s99 = sor.u32 %s97, %s98
      %p100 = scmp.eq.s32.totalorder %s99, 0
      %s102 = sadd.s32 %s101, 1
      %s103 = scalar_select %p100, %s101, %s102
      %p106 = pneg %p100
      %p107 = scmp.eq.s32.totalorder %s17, 7
      %p108 = por %p106, %p107
      %p109 = scmp.ne.s32.totalorder %s101, %s104
      %p110 = scmp.eq.s32.totalorder %s17, 0
      %p111 = por %p109, %p110
      %p112 = scmp.ne.s32.totalorder %s101, %s104
      %p113 = scmp.eq.s32.totalorder %s22, 7
      %p114 = por %p112, %p113
      %p115 = scmp.ne.s32.totalorder %s104, %s105
      %p116 = scmp.eq.s32.totalorder %s22, 0
      %p117 = por %p115, %p116
      %p118 = scmp.ne.s32.totalorder %s104, %s105
      %p119 = scmp.eq.s32.totalorder %s23, 7
      %p120 = por %p118, %p119
      %p122 = scmp.ne.s32.totalorder %s105, %s121
      %p123 = scmp.eq.s32.totalorder %s23, 0
      %p124 = por %p122, %p123
      %s125 = ssub.s32 %s27, %s38
      %s126 = ssub.s32 %s24, %s50
      %s127 = sor.u32 %s125, %s126
      %s128 = ssub.s32 %s25, %s46
      %s129 = sor.u32 %s127, %s128
      %s130 = ssub.s32 %s26, %s42
      %s131 = sor.u32 %s129, %s130
      %p132 = scmp.eq.s32.totalorder %s131, 0
      %s134 = sadd.s32 %s133, 1
      %s135 = scalar_select %p132, %s133, %s134
      %p138 = pneg %p132
      %p139 = scmp.eq.s32.totalorder %s17, 7
      %p140 = por %p138, %p139
      %p141 = scmp.ne.s32.totalorder %s133, %s136
      %p142 = scmp.eq.s32.totalorder %s17, 0
      %p143 = por %p141, %p142
      %p144 = scmp.ne.s32.totalorder %s133, %s136
      %p145 = scmp.eq.s32.totalorder %s22, 7
      %p146 = por %p144, %p145
      %p147 = scmp.ne.s32.totalorder %s136, %s137
      %p148 = scmp.eq.s32.totalorder %s22, 0
      %p149 = por %p147, %p148
      %p150 = scmp.ne.s32.totalorder %s136, %s137
      %p151 = scmp.eq.s32.totalorder %s23, 7
      %p152 = por %p150, %p151
      %p154 = scmp.ne.s32.totalorder %s137, %s153
      %p155 = scmp.eq.s32.totalorder %s23, 0
      %p156 = por %p154, %p155
      %p157 = scmp.le.s32.totalorder 1, %s17
      %p158 = scmp.lt.s32.totalorder %s17, 9
      %p159 = pnand %p157, %p158
      %p160 = pneg %p159
      // Predicated region
      $region9: #{tpu_custom_call.1} parent=5 // pred_check
        _
      $region10: #{tpu_custom_call.1} parent=5 // pred_check_branch
        %162 = sbr.rel (%p159) target = $region12
      $region11: #{tpu_custom_call.1} parent=5 // pred_region
        %s163 = ssub.s32 %s17, 1
        // Predicated region
        $region13: #{tpu_custom_call.1} parent=11 // pred_check
          %p164 = pneg %p64
        $region14: #{tpu_custom_call.1} parent=11 // pred_check_branch
          %166 = sbr.rel (%p164) target = $region16
        $region15: #{tpu_custom_call.1} parent=11 // pred_region
          %s168 = ssub.s32 16, 16
          %169 = vsyncadd [#allocation6], %s168
          %s171 = sshll.u32 %s0, 4
          %s172 = int_to_ptr.vmem [resolvable:$true] %s171
          %174 = dma.vmem_to_smem %s172, 16, [#allocation3], [#allocation6]
        $region16: #{tpu_custom_call.1} parent=11 // pred_fallthru
          _
        // Predicated region
        $region17: #{tpu_custom_call.1} parent=11 // pred_check
          %p175 = pneg %p85
        $region18: #{tpu_custom_call.1} parent=11 // pred_check_branch
          %177 = sbr.rel (%p175) target = $region20
        $region19: #{tpu_custom_call.1} parent=11 // pred_region
          %s179 = ssub.s32 16, 16
          %180 = vsyncadd [#allocation8], %s179
          %s182 = sshll.u32 %s1, 4
          %s183 = int_to_ptr.vmem [resolvable:$true] %s182
          %185 = dma.vmem_to_smem %s183, 16, [#allocation7], [#allocation8]
        $region20: #{tpu_custom_call.1} parent=11 // pred_fallthru
          _
      $region12: #{tpu_custom_call.1} parent=5 // pred_fallthru
        _
      %p186 = scmp.lt.s32.totalorder %s17, 8
      // Predicated region
      $region21: #{tpu_custom_call.1} parent=5 // pred_check
        %p187 = pneg %p186
      $region22: #{tpu_custom_call.1} parent=5 // pred_check_branch
        %189 = sbr.rel (%p187) target = $region24
      $region23: #{tpu_custom_call.1} parent=5 // pred_region
        // Predicated region
        $region25: #{tpu_custom_call.1} parent=23 // pred_check
          %p190 = pneg %p111
        $region26: #{tpu_custom_call.1} parent=23 // pred_check_branch
          %192 = sbr.rel (%p190) target = $region28
        $region27: #{tpu_custom_call.1} parent=23 // pred_region
          %s193 = sand.u32 %s101, 1
          %s194 = scalar_lea.sflag [#allocation4], %s193
          %s195 = sand.u32 %s101, 1
          %s196 = smul.addr %s195, 128
          %s197 = scalar_lea.vmem [#allocation9], %s196
          %s198 = smul.u32 16, %s25
          %s200 = ssub.s32 2048, 2048
          %201 = vsyncadd %s194, %s200
          %s202 = sadd.s32 %s26, %s198
          %s203 = smul.addr %s24, 16
          %s204 = sadd.s32 %s202, %s203
          %s205 = smul.addr %s27, 64
          %s206 = sadd.s32 %s204, %s205
          %s207 = smul.addr %s206, 128
          %s208 = scalar_lea.hbm %s2, %s207
          %s209 = sshll.u32 %s197, 4
          %s210 = int_to_ptr.vmem [resolvable:$true] %s209
          %215 = dma.hbm_to_vmem [thread:$0]  %s208, 2048, %s210, %s194, 128, 128, 8
        $region28: #{tpu_custom_call.1} parent=23 // pred_fallthru
          _
      $region24: #{tpu_custom_call.1} parent=5 // pred_fallthru
        _
      %p216 = scmp.le.s32.totalorder 1, %s17
      %p217 = scmp.lt.s32.totalorder %s17, 9
      %p218 = pnand %p216, %p217
      %p219 = pneg %p218
      // Predicated region
      $region29: #{tpu_custom_call.1} parent=5 // pred_check
        _
      $region30: #{tpu_custom_call.1} parent=5 // pred_check_branch
        %221 = sbr.rel (%p218) target = $region32
      $region31: #{tpu_custom_call.1} parent=5 // pred_region
        %s222 = ssub.s32 %s17, 1
        // Predicated region
        $region33: #{tpu_custom_call.1} parent=31 // pred_check
          %p223 = pneg %p64
        $region34: #{tpu_custom_call.1} parent=31 // pred_check_branch
          %225 = sbr.rel (%p223) target = $region36
        $region35: #{tpu_custom_call.1} parent=31 // pred_region
          %226 = dma.done [#allocation6], 16
        $region36: #{tpu_custom_call.1} parent=31 // pred_fallthru
          _
        // Predicated region
        $region37: #{tpu_custom_call.1} parent=31 // pred_check
          %p227 = pneg %p85
        $region38: #{tpu_custom_call.1} parent=31 // pred_check_branch
          %229 = sbr.rel (%p227) target = $region40
        $region39: #{tpu_custom_call.1} parent=31 // pred_region
          %230 = dma.done [#allocation8], 16
        $region40: #{tpu_custom_call.1} parent=31 // pred_fallthru
          _
        %s231 = sand.u32 %s104, 1
        %s232 = scalar_lea.sflag [#allocation4], %s231
        %s233 = sand.u32 %s104, 1
        %s234 = smul.addr %s233, 128
        %s235 = scalar_lea.vmem [#allocation9], %s234
        // Predicated region
        $region41: #{tpu_custom_call.1} parent=31 // pred_check
          %p236 = pneg %p117
        $region42: #{tpu_custom_call.1} parent=31 // pred_check_branch
          %238 = sbr.rel (%p236) target = $region44
        $region43: #{tpu_custom_call.1} parent=31 // pred_region
          %239 = dma.done %s232, 2048
        $region44: #{tpu_custom_call.1} parent=31 // pred_fallthru
          _
        %240 = sfence
        %p241 = pneg %p64
        %p242 = pneg %p61
        %p243 = pneg %p85
        %p244 = pneg %p82
        %s245 = sand.u32 %s104, 1
        %s246 = scalar_lea.sflag [#allocation4], %s245
        %s247 = sand.u32 %s104, 1
        %s248 = smul.addr %s247, 128
        %s249 = scalar_lea.vmem [#allocation9], %s248
        %p250 = pneg %p117
        %p251 = pneg %p114
        %p252 = pneg %p149
        %p253 = pneg %p146
        %s254 = sand.u32 %s136, 1
        %s255 = scalar_lea.sflag [#allocation5], %s254
        %s256 = sand.u32 %s136, 1
        %s257 = smul.addr %s256, 128
        %s258 = scalar_lea.vmem [#allocation10], %s257
        %s259 = smul.u32 16, %s29
        %s260 = smul.u32 16, %s29
        %p261 = scmp.eq.s32.totalorder %s31, 0
        // Predicated region
        $region45: #{tpu_custom_call.1} parent=31 // pred_check
          %p262 = pneg %p261
        $region46: #{tpu_custom_call.1} parent=31 // pred_check_branch
          %264 = sbr.rel (%p262) target = $region48
        $region47: #{tpu_custom_call.1} parent=31 // pred_region
          %s265 = sld [smem:[#allocation3 + %s28]]
          %s266 = smax.f32 %s265, 0.01
          %s267 = sld [smem:[#allocation7 + %s28]]
          %s268 = smax.f32 %s267, 0.01
          %v269 = vlaneseq
          %v270 = vshrl.u32 %v269, 7
          %v271 = vadd.s32 %v270, 8
          %v272 = vadd.s32 %v270, 16
          %v273 = vadd.s32 %v270, 24
          %v274 = vadd.s32 %v270, 32
          %v275 = vadd.s32 %v270, 40
          %v276 = vadd.s32 %v270, 48
          %v277 = vadd.s32 %v270, 56
          %v278 = vadd.s32 %v270, 64
          %v279 = vadd.s32 %v270, 72
          %v280 = vadd.s32 %v270, 80
          %v281 = vadd.s32 %v270, 88
          %v282 = vadd.s32 %v270, 96
          %v283 = vadd.s32 %v270, 104
          %v284 = vadd.s32 %v270, 112
          %v285 = vadd.s32 %v270, 120
          %s286 = smul.u32 %s29, 128
          %v287 = vstv %s286
          %v288 = vadd.s32 %v270, %v287
          %v289 = vadd.s32 %v271, %v287
          %v290 = vadd.s32 %v272, %v287
          %v291 = vadd.s32 %v273, %v287
          %v292 = vadd.s32 %v274, %v287
          %v293 = vadd.s32 %v275, %v287
          %v294 = vadd.s32 %v276, %v287
          %v295 = vadd.s32 %v277, %v287
          %v296 = vadd.s32 %v278, %v287
          %v297 = vadd.s32 %v279, %v287
          %v298 = vadd.s32 %v280, %v287
          %v299 = vadd.s32 %v281, %v287
          %v300 = vadd.s32 %v282, %v287
          %v301 = vadd.s32 %v283, %v287
          %v302 = vadd.s32 %v284, %v287
          %v303 = vadd.s32 %v285, %v287
          %v304 = vlaneseq
          %v305 = vand.u32 %v304, 127
          %s306 = smul.u32 %s30, 128
          %v307 = vstv %s306
          %v308 = vadd.s32 %v305, %v307
          %v309 = vsub.s32 %v288, %v308
          %v310 = vsub.s32 %v289, %v308
          %v311 = vsub.s32 %v290, %v308
          %v312 = vsub.s32 %v291, %v308
          %v313 = vsub.s32 %v292, %v308
          %v314 = vsub.s32 %v293, %v308
          %v315 = vsub.s32 %v294, %v308
          %v316 = vsub.s32 %v295, %v308
          %v317 = vsub.s32 %v296, %v308
          %v318 = vsub.s32 %v297, %v308
          %v319 = vsub.s32 %v298, %v308
          %v320 = vsub.s32 %v299, %v308
          %v321 = vsub.s32 %v300, %v308
          %v322 = vsub.s32 %v301, %v308
          %v323 = vsub.s32 %v302, %v308
          %v324 = vsub.s32 %v303, %v308
          %vm325 = vcmp.gt.s32.totalorder %v309, 0
          %v326 = vsel %vm325, %v309, 0
          %vm327 = vcmp.gt.s32.totalorder %v310, 0
          %v328 = vsel %vm327, %v310, 0
          %vm329 = vcmp.gt.s32.totalorder %v311, 0
          %v330 = vsel %vm329, %v311, 0
          %vm331 = vcmp.gt.s32.totalorder %v312, 0
          %v332 = vsel %vm331, %v312, 0
          %vm333 = vcmp.gt.s32.totalorder %v313, 0
          %v334 = vsel %vm333, %v313, 0
          %vm335 = vcmp.gt.s32.totalorder %v314, 0
          %v336 = vsel %vm335, %v314, 0
          %vm337 = vcmp.gt.s32.totalorder %v315, 0
          %v338 = vsel %vm337, %v315, 0
          %vm339 = vcmp.gt.s32.totalorder %v316, 0
          %v340 = vsel %vm339, %v316, 0
          %vm341 = vcmp.gt.s32.totalorder %v317, 0
          %v342 = vsel %vm341, %v317, 0
          %vm343 = vcmp.gt.s32.totalorder %v318, 0
          %v344 = vsel %vm343, %v318, 0
          %vm345 = vcmp.gt.s32.totalorder %v319, 0
          %v346 = vsel %vm345, %v319, 0
          %vm347 = vcmp.gt.s32.totalorder %v320, 0
          %v348 = vsel %vm347, %v320, 0
          %vm349 = vcmp.gt.s32.totalorder %v321, 0
          %v350 = vsel %vm349, %v321, 0
          %vm351 = vcmp.gt.s32.totalorder %v322, 0
          %v352 = vsel %vm351, %v322, 0
          %vm353 = vcmp.gt.s32.totalorder %v323, 0
          %v354 = vsel %vm353, %v323, 0
          %vm355 = vcmp.gt.s32.totalorder %v324, 0
          %v356 = vsel %vm355, %v324, 0
          %v357 = vcvt.s32.f32 %v326
          %v358 = vcvt.s32.f32 %v328
          %v359 = vcvt.s32.f32 %v330
          %v360 = vcvt.s32.f32 %v332
          %v361 = vcvt.s32.f32 %v334
          %v362 = vcvt.s32.f32 %v336
          %v363 = vcvt.s32.f32 %v338
          %v364 = vcvt.s32.f32 %v340
          %v365 = vcvt.s32.f32 %v342
          %v366 = vcvt.s32.f32 %v344
          %v367 = vcvt.s32.f32 %v346
          %v368 = vcvt.s32.f32 %v348
          %v369 = vcvt.s32.f32 %v350
          %v370 = vcvt.s32.f32 %v352
          %v371 = vcvt.s32.f32 %v354
          %v372 = vcvt.s32.f32 %v356
          %s373 = ssub.f32 0.0, %s266
          %v374 = vstv %s268
          %v375 = vmul.f32 %v374, %v357
          %v376 = vmul.f32 %v374, %v358
          %v377 = vmul.f32 %v374, %v359
          %v378 = vmul.f32 %v374, %v360
          %v379 = vmul.f32 %v374, %v361
          %v380 = vmul.f32 %v374, %v362
          %v381 = vmul.f32 %v374, %v363
          %v382 = vmul.f32 %v374, %v364
          %v383 = vmul.f32 %v374, %v365
          %v384 = vmul.f32 %v374, %v366
          %v385 = vmul.f32 %v374, %v367
          %v386 = vmul.f32 %v374, %v368
          %v387 = vmul.f32 %v374, %v369
          %v388 = vmul.f32 %v374, %v370
          %v389 = vmul.f32 %v374, %v371
          %v390 = vmul.f32 %v374, %v372
          %v391 = vadd.f32 %v375, 1.0
          %v392 = vlog2.pop %v391
          %v393 = vmul.f32 %v392, 0.6931472
          %v394 = vmul.f32 -0.5, %v375
          %v395 = vadd.f32 %v394, 1.0
          %v396 = vmul.f32 %v395, %v375
          %v397 = vand.u32 2147483647, %v375
          %vm398 = vcmp.lt.f32.partialorder %v397, 0.0004427343
          %v399 = vsel %vm398, %v396, %v393
          %v400 = vadd.f32 %v376, 1.0
          %v401 = vlog2.pop %v400
          %v402 = vmul.f32 %v401, 0.6931472
          %v403 = vmul.f32 -0.5, %v376
          %v404 = vadd.f32 %v403, 1.0
          %v405 = vmul.f32 %v404, %v376
          %v406 = vand.u32 2147483647, %v376
          %vm407 = vcmp.lt.f32.partialorder %v406, 0.0004427343
          %v408 = vsel %vm407, %v405, %v402
          %v409 = vadd.f32 %v377, 1.0
          %v410 = vlog2.pop %v409
          %v411 = vmul.f32 %v410, 0.6931472
          %v412 = vmul.f32 -0.5, %v377
          %v413 = vadd.f32 %v412, 1.0
          %v414 = vmul.f32 %v413, %v377
          %v415 = vand.u32 2147483647, %v377
          %vm416 = vcmp.lt.f32.partialorder %v415, 0.0004427343
          %v417 = vsel %vm416, %v414, %v411
          %v418 = vadd.f32 %v378, 1.0
          %v419 = vlog2.pop %v418
          %v420 = vmul.f32 %v419, 0.6931472
          %v421 = vmul.f32 -0.5, %v378
          %v422 = vadd.f32 %v421, 1.0
          %v423 = vmul.f32 %v422, %v378
          %v424 = vand.u32 2147483647, %v378
          %vm425 = vcmp.lt.f32.partialorder %v424, 0.0004427343
          %v426 = vsel %vm425, %v423, %v420
          %v427 = vadd.f32 %v379, 1.0
          %v428 = vlog2.pop %v427
          %v429 = vmul.f32 %v428, 0.6931472
          %v430 = vmul.f32 -0.5, %v379
          %v431 = vadd.f32 %v430, 1.0
          %v432 = vmul.f32 %v431, %v379
          %v433 = vand.u32 2147483647, %v379
          %vm434 = vcmp.lt.f32.partialorder %v433, 0.0004427343
          %v435 = vsel %vm434, %v432, %v429
          %v436 = vadd.f32 %v380, 1.0
          %v437 = vlog2.pop %v436
          %v438 = vmul.f32 %v437, 0.6931472
          %v439 = vmul.f32 -0.5, %v380
          %v440 = vadd.f32 %v439, 1.0
          %v441 = vmul.f32 %v440, %v380
          %v442 = vand.u32 2147483647, %v380
          %vm443 = vcmp.lt.f32.partialorder %v442, 0.0004427343
          %v444 = vsel %vm443, %v441, %v438
          %v445 = vadd.f32 %v381, 1.0
          %v446 = vlog2.pop %v445
          %v447 = vmul.f32 %v446, 0.6931472
          %v448 = vmul.f32 -0.5, %v381
          %v449 = vadd.f32 %v448, 1.0
          %v450 = vmul.f32 %v449, %v381
          %v451 = vand.u32 2147483647, %v381
          %vm452 = vcmp.lt.f32.partialorder %v451, 0.0004427343
          %v453 = vsel %vm452, %v450, %v447
          %v454 = vadd.f32 %v382, 1.0
          %v455 = vlog2.pop %v454
          %v456 = vmul.f32 %v455, 0.6931472
          %v457 = vmul.f32 -0.5, %v382
          %v458 = vadd.f32 %v457, 1.0
          %v459 = vmul.f32 %v458, %v382
          %v460 = vand.u32 2147483647, %v382
          %vm461 = vcmp.lt.f32.partialorder %v460, 0.0004427343
          %v462 = vsel %vm461, %v459, %v456
          %v463 = vadd.f32 %v383, 1.0
          %v464 = vlog2.pop %v463
          %v465 = vmul.f32 %v464, 0.6931472
          %v466 = vmul.f32 -0.5, %v383
          %v467 = vadd.f32 %v466, 1.0
          %v468 = vmul.f32 %v467, %v383
          %v469 = vand.u32 2147483647, %v383
          %vm470 = vcmp.lt.f32.partialorder %v469, 0.0004427343
          %v471 = vsel %vm470, %v468, %v465
          %v472 = vadd.f32 %v384, 1.0
          %v473 = vlog2.pop %v472
          %v474 = vmul.f32 %v473, 0.6931472
          %v475 = vmul.f32 -0.5, %v384
          %v476 = vadd.f32 %v475, 1.0
          %v477 = vmul.f32 %v476, %v384
          %v478 = vand.u32 2147483647, %v384
          %vm479 = vcmp.lt.f32.partialorder %v478, 0.0004427343
          %v480 = vsel %vm479, %v477, %v474
          %v481 = vadd.f32 %v385, 1.0
          %v482 = vlog2.pop %v481
          %v483 = vmul.f32 %v482, 0.6931472
          %v484 = vmul.f32 -0.5, %v385
          %v485 = vadd.f32 %v484, 1.0
          %v486 = vmul.f32 %v485, %v385
          %v487 = vand.u32 2147483647, %v385
          %vm488 = vcmp.lt.f32.partialorder %v487, 0.0004427343
          %v489 = vsel %vm488, %v486, %v483
          %v490 = vadd.f32 %v386, 1.0
          %v491 = vlog2.pop %v490
          %v492 = vmul.f32 %v491, 0.6931472
          %v493 = vmul.f32 -0.5, %v386
          %v494 = vadd.f32 %v493, 1.0
          %v495 = vmul.f32 %v494, %v386
          %v496 = vand.u32 2147483647, %v386
          %vm497 = vcmp.lt.f32.partialorder %v496, 0.0004427343
          %v498 = vsel %vm497, %v495, %v492
          %v499 = vadd.f32 %v387, 1.0
          %v500 = vlog2.pop %v499
          %v501 = vmul.f32 %v500, 0.6931472
          %v502 = vmul.f32 -0.5, %v387
          %v503 = vadd.f32 %v502, 1.0
          %v504 = vmul.f32 %v503, %v387
          %v505 = vand.u32 2147483647, %v387
          %vm506 = vcmp.lt.f32.partialorder %v505, 0.0004427343
          %v507 = vsel %vm506, %v504, %v501
          %v508 = vadd.f32 %v388, 1.0
          %v509 = vlog2.pop %v508
          %v510 = vmul.f32 %v509, 0.6931472
          %v511 = vmul.f32 -0.5, %v388
          %v512 = vadd.f32 %v511, 1.0
          %v513 = vmul.f32 %v512, %v388
          %v514 = vand.u32 2147483647, %v388
          %vm515 = vcmp.lt.f32.partialorder %v514, 0.0004427343
          %v516 = vsel %vm515, %v513, %v510
          %v517 = vadd.f32 %v389, 1.0
          %v518 = vlog2.pop %v517
          %v519 = vmul.f32 %v518, 0.6931472
          %v520 = vmul.f32 -0.5, %v389
          %v521 = vadd.f32 %v520, 1.0
          %v522 = vmul.f32 %v521, %v389
          %v523 = vand.u32 2147483647, %v389
          %vm524 = vcmp.lt.f32.partialorder %v523, 0.0004427343
          %v525 = vsel %vm524, %v522, %v519
          %v526 = vadd.f32 %v390, 1.0
          %v527 = vlog2.pop %v526
          %v528 = vmul.f32 %v527, 0.6931472
          %v529 = vmul.f32 -0.5, %v390
          %v530 = vadd.f32 %v529, 1.0
          %v531 = vmul.f32 %v530, %v390
          %v532 = vand.u32 2147483647, %v390
          %vm533 = vcmp.lt.f32.partialorder %v532, 0.0004427343
          %v534 = vsel %vm533, %v531, %v528
          %v535 = vstv %s373
          %v536 = vmul.f32 %v535, %v399
          %v537 = vmul.f32 %v535, %v408
          %v538 = vmul.f32 %v535, %v417
          %v539 = vmul.f32 %v535, %v426
          %v540 = vmul.f32 %v535, %v435
          %v541 = vmul.f32 %v535, %v444
          %v542 = vmul.f32 %v535, %v453
          %v543 = vmul.f32 %v535, %v462
          %v544 = vmul.f32 %v535, %v471
          %v545 = vmul.f32 %v535, %v480
          %v546 = vmul.f32 %v535, %v489
          %v547 = vmul.f32 %v535, %v498
          %v548 = vmul.f32 %v535, %v507
          %v549 = vmul.f32 %v535, %v516
          %v550 = vmul.f32 %v535, %v525
          %v551 = vmul.f32 %v535, %v534
          %552 = vst [vmem:[#allocation2] sm:$0xff] %v536
          %553 = vst [vmem:[#allocation2 + $0x8] sm:$0xff] %v537
          %554 = vst [vmem:[#allocation2 + $0x10] sm:$0xff] %v538
          %555 = vst [vmem:[#allocation2 + $0x18] sm:$0xff] %v539
          %556 = vst [vmem:[#allocation2 + $0x20] sm:$0xff] %v540
          %557 = vst [vmem:[#allocation2 + $0x28] sm:$0xff] %v541
          %558 = vst [vmem:[#allocation2 + $0x30] sm:$0xff] %v542
          %559 = vst [vmem:[#allocation2 + $0x38] sm:$0xff] %v543
          %560 = vst [vmem:[#allocation2 + $0x40] sm:$0xff] %v544
          %561 = vst [vmem:[#allocation2 + $0x48] sm:$0xff] %v545
          %562 = vst [vmem:[#allocation2 + $0x50] sm:$0xff] %v546
          %563 = vst [vmem:[#allocation2 + $0x58] sm:$0xff] %v547
          %564 = vst [vmem:[#allocation2 + $0x60] sm:$0xff] %v548
          %565 = vst [vmem:[#allocation2 + $0x68] sm:$0xff] %v549
          %566 = vst [vmem:[#allocation2 + $0x70] sm:$0xff] %v550
          %567 = vst [vmem:[#allocation2 + $0x78] sm:$0xff] %v551
        $region48: #{tpu_custom_call.1} parent=31 // pred_fallthru
          _
        %v568 = vld [vmem:[%s235] sm:$0xff]
        %v569 = vld [vmem:[%s235 + $0x8] sm:$0xff]
        %v570 = vld [vmem:[%s235 + $0x10] sm:$0xff]
        %v571 = vld [vmem:[%s235 + $0x18] sm:$0xff]
        %v572 = vld [vmem:[%s235 + $0x20] sm:$0xff]
        %v573 = vld [vmem:[%s235 + $0x28] sm:$0xff]
        %v574 = vld [vmem:[%s235 + $0x30] sm:$0xff]
        %v575 = vld [vmem:[%s235 + $0x38] sm:$0xff]
        %v576 = vld [vmem:[%s235 + $0x40] sm:$0xff]
        %v577 = vld [vmem:[%s235 + $0x48] sm:$0xff]
        %v578 = vld [vmem:[%s235 + $0x50] sm:$0xff]
        %v579 = vld [vmem:[%s235 + $0x58] sm:$0xff]
        %v580 = vld [vmem:[%s235 + $0x60] sm:$0xff]
        %v581 = vld [vmem:[%s235 + $0x68] sm:$0xff]
        %v582 = vld [vmem:[%s235 + $0x70] sm:$0xff]
        %v583 = vld [vmem:[%s235 + $0x78] sm:$0xff]
        %v584 = vld [vmem:[#allocation2] sm:$0xff]
        %v585 = vld [vmem:[#allocation2 + $0x8] sm:$0xff]
        %v586 = vld [vmem:[#allocation2 + $0x10] sm:$0xff]
        %v587 = vld [vmem:[#allocation2 + $0x18] sm:$0xff]
        %v588 = vld [vmem:[#allocation2 + $0x20] sm:$0xff]
        %v589 = vld [vmem:[#allocation2 + $0x28] sm:$0xff]
        %v590 = vld [vmem:[#allocation2 + $0x30] sm:$0xff]
        %v591 = vld [vmem:[#allocation2 + $0x38] sm:$0xff]
        %v592 = vld [vmem:[#allocation2 + $0x40] sm:$0xff]
        %v593 = vld [vmem:[#allocation2 + $0x48] sm:$0xff]
        %v594 = vld [vmem:[#allocation2 + $0x50] sm:$0xff]
        %v595 = vld [vmem:[#allocation2 + $0x58] sm:$0xff]
        %v596 = vld [vmem:[#allocation2 + $0x60] sm:$0xff]
        %v597 = vld [vmem:[#allocation2 + $0x68] sm:$0xff]
        %v598 = vld [vmem:[#allocation2 + $0x70] sm:$0xff]
        %v599 = vld [vmem:[#allocation2 + $0x78] sm:$0xff]
        %v600 = vadd.f32 %v568, %v584
        %v601 = vadd.f32 %v569, %v585
        %v602 = vadd.f32 %v570, %v586
        %v603 = vadd.f32 %v571, %v587
        %v604 = vadd.f32 %v572, %v588
        %v605 = vadd.f32 %v573, %v589
        %v606 = vadd.f32 %v574, %v590
        %v607 = vadd.f32 %v575, %v591
        %v608 = vadd.f32 %v576, %v592
        %v609 = vadd.f32 %v577, %v593
        %v610 = vadd.f32 %v578, %v594
        %v611 = vadd.f32 %v579, %v595
        %v612 = vadd.f32 %v580, %v596
        %v613 = vadd.f32 %v581, %v597
        %v614 = vadd.f32 %v582, %v598
        %v615 = vadd.f32 %v583, %v599
        %616 = vst [vmem:[%s258] sm:$0xff] %v600
        %617 = vst [vmem:[%s258 + $0x8] sm:$0xff] %v601
        %618 = vst [vmem:[%s258 + $0x10] sm:$0xff] %v602
        %619 = vst [vmem:[%s258 + $0x18] sm:$0xff] %v603
        %620 = vst [vmem:[%s258 + $0x20] sm:$0xff] %v604
        %621 = vst [vmem:[%s258 + $0x28] sm:$0xff] %v605
        %622 = vst [vmem:[%s258 + $0x30] sm:$0xff] %v606
        %623 = vst [vmem:[%s258 + $0x38] sm:$0xff] %v607
        %624 = vst [vmem:[%s258 + $0x40] sm:$0xff] %v608
        %625 = vst [vmem:[%s258 + $0x48] sm:$0xff] %v609
        %626 = vst [vmem:[%s258 + $0x50] sm:$0xff] %v610
        %627 = vst [vmem:[%s258 + $0x58] sm:$0xff] %v611
        %628 = vst [vmem:[%s258 + $0x60] sm:$0xff] %v612
        %629 = vst [vmem:[%s258 + $0x68] sm:$0xff] %v613
        %630 = vst [vmem:[%s258 + $0x70] sm:$0xff] %v614
        %631 = vst [vmem:[%s258 + $0x78] sm:$0xff] %v615
        %s632 = sand.u32 %s136, 1
        %s633 = scalar_lea.sflag [#allocation5], %s632
        %s634 = sand.u32 %s136, 1
        %s635 = smul.addr %s634, 128
        %s636 = scalar_lea.vmem [#allocation10], %s635
        // Predicated region
        $region49: #{tpu_custom_call.1} parent=31 // pred_check
          %p637 = pneg %p146
        $region50: #{tpu_custom_call.1} parent=31 // pred_check_branch
          %639 = sbr.rel (%p637) target = $region52
        $region51: #{tpu_custom_call.1} parent=31 // pred_region
          %s640 = smul.u32 16, %s29
          %s642 = ssub.s32 2048, 2048
          %643 = vsyncadd %s633, %s642
          %s644 = sadd.s32 %s30, %s640
          %s645 = smul.addr %s28, 16
          %s646 = sadd.s32 %s644, %s645
          %s647 = smul.addr %s31, 64
          %s648 = sadd.s32 %s646, %s647
          %s649 = smul.addr %s648, 128
          %s650 = scalar_lea.hbm %s3, %s649
          %s651 = sshll.u32 %s636, 4
          %s652 = int_to_ptr.vmem [resolvable:$true] %s651
          %657 = dma.vmem_to_hbm [thread:$0]  %s652, 2048, %s650, %s633, 128, 128, 8
        $region52: #{tpu_custom_call.1} parent=31 // pred_fallthru
          _
      $region32: #{tpu_custom_call.1} parent=5 // pred_fallthru
        _
      %p658 = scmp.le.s32.totalorder 2, %s17
      // Predicated region
      $region53: #{tpu_custom_call.1} parent=5 // pred_check
        %p659 = pneg %p658
      $region54: #{tpu_custom_call.1} parent=5 // pred_check_branch
        %661 = sbr.rel (%p659) target = $region56
      $region55: #{tpu_custom_call.1} parent=5 // pred_region
        %s662 = ssub.s32 %s17, 2
        // Predicated region
        $region57: #{tpu_custom_call.1} parent=55 // pred_check
          %p663 = pneg %p152
        $region58: #{tpu_custom_call.1} parent=55 // pred_check_branch
          %665 = sbr.rel (%p663) target = $region60
        $region59: #{tpu_custom_call.1} parent=55 // pred_region
          %s666 = sand.u32 %s137, 1
          %s667 = scalar_lea.sflag [#allocation5], %s666
          %s668 = sand.u32 %s137, 1
          %s669 = smul.addr %s668, 128
          %s670 = scalar_lea.vmem [#allocation10], %s669
          %671 = dma.done %s667, 2048
        $region60: #{tpu_custom_call.1} parent=55 // pred_fallthru
          _
      $region56: #{tpu_custom_call.1} parent=5 // pred_fallthru
        _
    $region6: #{tpu_custom_call.1} parent=1 // loop_footer
      %s21 = sadd.s32 1, %s17
    $region7: #{tpu_custom_call.1} parent=1 // loop_footer_branch
      %16 = sbr.rel target = $region3
    $region8: #{tpu_custom_call.1} parent=1 // loop_exit
      _
    %672 = vsyncpa [#allocation4], 1
    %s673 = scalar_lea.sflag [#allocation4], 1
    %674 = vsyncpa %s673, 1
    %675 = vsyncpa [#allocation5], 1
    %s676 = scalar_lea.sflag [#allocation5], 1
    %677 = vsyncpa %s676, 1
    %678 = vsyncpa [#allocation6], 1
    %s679 = scalar_lea.sflag [#allocation6], 1
    %680 = vsyncpa %s679, 1
    %681 = vsyncpa [#allocation8], 1

</llo_original>
